<compile_context>
chip_gen: v7x
topology: tpu7x:2x2x1
jax: 0.10.0
libtpu: 0.0.40
codegen_flags: <defaults>
</compile_context>

<pallas_src>
import functools

import jax
import jax.numpy as jnp
from jax.experimental import pallas as pl
from jax.experimental.pallas import tpu as pltpu


def _kto_kernel(pc_ref, pr_ref, pk_ref, rc_ref, rr_ref, rk_ref,
                crew_ref, rrew_ref, scal_ref, *,
                beta, c_scale, r_scale, inv_nk_ws):
    # ---- KL term: mean over the KL batch, (simulated) all-reduce, clamp(min=0)
    # TODO(synk): dist.nn.all_reduce of the KL mean across ranks is not
    # implemented here; world_size only enters as a divisor (exact for
    # world_size == 1). For multi-device use, psum the KL sum outside the
    # kernel (or use a remote-DMA collective) before the clamp.
    kl = jnp.maximum(jnp.sum(pk_ref[...] - rk_ref[...]) * inv_nk_ws, 0.0)

    # ---- chosen branch: one full-tile sub, one full-tile store, one sigmoid.
    # 1 - sigmoid(x) == sigmoid(-x): fewer VALU ops, no cancellation.
    chosen_lr = pc_ref[...] - rc_ref[...]
    crew_ref[...] = beta * chosen_lr                      # detach = identity fwd
    chosen_loss_sum = jnp.sum(jax.nn.sigmoid(beta * (kl - chosen_lr)))

    # ---- rejected branch
    rejected_lr = pr_ref[...] - rr_ref[...]
    rrew_ref[...] = beta * rejected_lr                    # detach = identity fwd
    rejected_loss_sum = jnp.sum(jax.nn.sigmoid(beta * (rejected_lr - kl)))

    # ---- losses = mean(cat(dw*chosen, uw*rejected)); dw/(nc+nr), uw/(nc+nr)
    # are pre-folded into c_scale / r_scale.
    scal_ref[0] = c_scale * chosen_loss_sum + r_scale * rejected_loss_sum
    scal_ref[1] = kl


def kto_loss(policy_chosen_logps,
             policy_rejected_logps,
             policy_KL_logps,
             reference_chosen_logps,
             reference_rejected_logps,
             reference_KL_logps,
             *,
             beta=0.1,
             desirable_weight=1.0,
             undesirable_weight=1.0,
             world_size=1):
    nc = int(policy_chosen_logps.shape[0])
    nr = int(policy_rejected_logps.shape[0])
    nk = int(policy_KL_logps.shape[0])
    # TODO(synk): the PyTorch module special-cases empty chosen/rejected batches
    # (shape[0] == 0 -> empty tensors); here we require non-empty inputs.
    assert nc != 0 and nr != 0 and nk != 0

    f32 = jnp.float32

    def as_row(v):
        return v.astype(f32).reshape(1, -1)       # (1, n): free layout change

    kernel = functools.partial(
        _kto_kernel,
        beta=float(beta),
        c_scale=float(desirable_weight) / float(nc + nr),
        r_scale=float(undesirable_weight) / float(nc + nr),
        inv_nk_ws=1.0 / (float(nk) * float(world_size)),
    )

    vmem = pl.BlockSpec(memory_space=pltpu.MemorySpace.VMEM)
    smem = pl.BlockSpec(memory_space=pltpu.MemorySpace.SMEM)

    n_total = nc + nr + nk
    cost = pl.CostEstimate(
        flops=10 * n_total,                       # subs, muls, selects, sums
        transcendentals=nc + nr,                  # one sigmoid per loss element
        bytes_accessed=4 * (2 * n_total + nc + nr + 2),
    )

    # TODO(synk): forward only; KL.detach()/rewards.detach() semantics under
    # jax.grad would need a custom_vjp with stop_gradient.
    crew, rrew, scalars = pl.pallas_call(
        kernel,
        out_shape=(
            jax.ShapeDtypeStruct((1, nc), f32),   # chosen_rewards
            jax.ShapeDtypeStruct((1, nr), f32),   # rejected_rewards
            jax.ShapeDtypeStruct((2,), f32),      # [loss, KL] scalars in SMEM
        ),
        in_specs=[vmem] * 6,
        out_specs=(vmem, vmem, smem),
        cost_estimate=cost,
    )(as_row(policy_chosen_logps),
      as_row(policy_rejected_logps),
      as_row(policy_KL_logps),
      as_row(reference_chosen_logps),
      as_row(reference_rejected_logps),
      as_row(reference_KL_logps))

    return scalars[0], crew[0], rrew[0], scalars[1]


if __name__ == "__main__":
    key = jax.random.PRNGKey(0)
    k = jax.random.split(key, 6)

    # deliberately unequal batch sizes to exercise the per-branch shapes
    n_chosen, n_rejected, n_kl = 8, 5, 7
    policy_chosen = -jax.random.uniform(k[0], (n_chosen,), jnp.float32) * 5.0
    policy_rejected = -jax.random.uniform(k[1], (n_rejected,), jnp.float32) * 5.0
    policy_kl = -jax.random.uniform(k[2], (n_kl,), jnp.float32) * 5.0
    ref_chosen = -jax.random.uniform(k[3], (n_chosen,), jnp.float32) * 5.0
    ref_rejected = -jax.random.uniform(k[4], (n_rejected,), jnp.float32) * 5.0
    ref_kl = -jax.random.uniform(k[5], (n_kl,), jnp.float32) * 5.0

    beta, dw, uw, world_size = 0.1, 1.0, 1.0, 1

    losses, chosen_rewards, rejected_rewards, KL = kto_loss(
        policy_chosen, policy_rejected, policy_kl,
        ref_chosen, ref_rejected, ref_kl,
        beta=beta, desirable_weight=dw, undesirable_weight=uw,
        world_size=world_size,
    )
    jax.block_until_ready((losses, chosen_rewards, rejected_rewards, KL))

    # pure-JAX reference check
    kl_ref_val = jnp.clip(jnp.mean(policy_kl - ref_kl) / world_size, 0.0, None)
    c_lr = policy_chosen - ref_chosen
    r_lr = policy_rejected - ref_rejected
    c_losses = 1.0 - jax.nn.sigmoid(beta * (c_lr - kl_ref_val))
    r_losses = 1.0 - jax.nn.sigmoid(beta * (kl_ref_val - r_lr))
    loss_ref_val = jnp.mean(jnp.concatenate([dw * c_losses, uw * r_losses]))

    assert losses.shape == () or losses.shape == (1,)
    assert chosen_rewards.shape == (n_chosen,)
    assert rejected_rewards.shape == (n_rejected,)
    assert jnp.allclose(losses, loss_ref_val, rtol=1e-5, atol=1e-6)
    assert jnp.allclose(chosen_rewards, beta * c_lr, rtol=1e-5, atol=1e-6)
    assert jnp.allclose(rejected_rewards, beta * r_lr, rtol=1e-5, atol=1e-6)
    assert jnp.allclose(KL, kl_ref_val, rtol=1e-5, atol=1e-6)

    print("KERNEL_OK")
</pallas_src>

<mosaic_0001>
module attributes {stable_mosaic.version = 11 : i64} {
  func.func @_kto_kernel(%arg0: memref<1x8xf32, #tpu.memory_space<vmem>>, %arg1: memref<1x5xf32, #tpu.memory_space<vmem>>, %arg2: memref<1x7xf32, #tpu.memory_space<vmem>>, %arg3: memref<1x8xf32, #tpu.memory_space<vmem>>, %arg4: memref<1x5xf32, #tpu.memory_space<vmem>>, %arg5: memref<1x7xf32, #tpu.memory_space<vmem>>, %arg6: memref<1x8xf32, #tpu.memory_space<vmem>>, %arg7: memref<1x5xf32, #tpu.memory_space<vmem>>, %arg8: memref<2xf32, #tpu.memory_space<smem>>) attributes {dimension_semantics = [], scalar_prefetch = 0 : i64, scratch_operands = 0 : i64, tpu.core_type = #tpu.core_type<tc>} {
    %c0 = arith.constant 0 : index
    %c0_0 = arith.constant 0 : index
    %0 = vector.load %arg2[%c0, %c0_0] : memref<1x7xf32, #tpu.memory_space<vmem>>, vector<1x7xf32>
    %c0_1 = arith.constant 0 : index
    %c0_2 = arith.constant 0 : index
    %1 = vector.load %arg5[%c0_1, %c0_2] : memref<1x7xf32, #tpu.memory_space<vmem>>, vector<1x7xf32>
    %2 = arith.subf %0, %1 : vector<1x7xf32>
    %3 = vector.shape_cast %2 : vector<1x7xf32> to vector<1x1x7xf32>
    %cst = arith.constant dense<0.000000e+00> : vector<1xf32>
    %4 = vector.multi_reduction <add>, %3, %cst [1, 2] : vector<1x1x7xf32> to vector<1xf32>
    %5 = vector.shape_cast %4 : vector<1xf32> to vector<1x1x1xf32>
    %6 = vector.extract %5[0, 0, 0] : f32 from vector<1x1x1xf32>
    %cst_3 = arith.constant 0.142857149 : f32
    %7 = arith.mulf %6, %cst_3 : f32
    %cst_4 = arith.constant 0.000000e+00 : f32
    %8 = arith.maximumf %7, %cst_4 : f32
    %c0_5 = arith.constant 0 : index
    %c0_6 = arith.constant 0 : index
    %9 = vector.load %arg0[%c0_5, %c0_6] : memref<1x8xf32, #tpu.memory_space<vmem>>, vector<1x8xf32>
    %c0_7 = arith.constant 0 : index
    %c0_8 = arith.constant 0 : index
    %10 = vector.load %arg3[%c0_7, %c0_8] : memref<1x8xf32, #tpu.memory_space<vmem>>, vector<1x8xf32>
    %11 = arith.subf %9, %10 : vector<1x8xf32>
    %cst_9 = arith.constant 1.000000e-01 : f32
    %12 = vector.broadcast %cst_9 : f32 to vector<1x8xf32>
    %13 = arith.mulf %12, %11 : vector<1x8xf32>
    %c0_10 = arith.constant 0 : index
    %c0_11 = arith.constant 0 : index
    %14 = vector.load %arg6[%c0_10, %c0_11] : memref<1x8xf32, #tpu.memory_space<vmem>>, vector<1x8xf32>
    tpu.vector_store %arg6[%c0_10, %c0_11], %13 {strides = array<i32>} : memref<1x8xf32, #tpu.memory_space<vmem>>, vector<1x8xf32>,
    %15 = vector.broadcast %8 : f32 to vector<1x8xf32>
    %16 = arith.subf %15, %11 : vector<1x8xf32>
    %cst_12 = arith.constant 1.000000e-01 : f32
    %17 = vector.broadcast %cst_12 : f32 to vector<1x8xf32>
    %18 = arith.mulf %17, %16 : vector<1x8xf32>
    %19 = arith.negf %18 : vector<1x8xf32>
    %20 = math.exp %19 : vector<1x8xf32>
    %cst_13 = arith.constant 1.000000e+00 : f32
    %21 = vector.broadcast %cst_13 : f32 to vector<1x8xf32>
    %22 = arith.addf %21, %20 : vector<1x8xf32>
    %23 = arith.divf %21, %22 : vector<1x8xf32>
    %24 = vector.shape_cast %23 : vector<1x8xf32> to vector<1x1x8xf32>
    %cst_14 = arith.constant dense<0.000000e+00> : vector<1xf32>
    %25 = vector.multi_reduction <add>, %24, %cst_14 [1, 2] : vector<1x1x8xf32> to vector<1xf32>
    %26 = vector.shape_cast %25 : vector<1xf32> to vector<1x1x1xf32>
    %27 = vector.extract %26[0, 0, 0] : f32 from vector<1x1x1xf32>
    %c0_15 = arith.constant 0 : index
    %c0_16 = arith.constant 0 : index
    %28 = vector.load %arg1[%c0_15, %c0_16] : memref<1x5xf32, #tpu.memory_space<vmem>>, vector<1x5xf32>
    %c0_17 = arith.constant 0 : index
    %c0_18 = arith.constant 0 : index
    %29 = vector.load %arg4[%c0_17, %c0_18] : memref<1x5xf32, #tpu.memory_space<vmem>>, vector<1x5xf32>
    %30 = arith.subf %28, %29 : vector<1x5xf32>
    %cst_19 = arith.constant 1.000000e-01 : f32
    %31 = vector.broadcast %cst_19 : f32 to vector<1x5xf32>
    %32 = arith.mulf %31, %30 : vector<1x5xf32>
    %c0_20 = arith.constant 0 : index
    %c0_21 = arith.constant 0 : index
    %33 = vector.load %arg7[%c0_20, %c0_21] : memref<1x5xf32, #tpu.memory_space<vmem>>, vector<1x5xf32>
    tpu.vector_store %arg7[%c0_20, %c0_21], %32 {strides = array<i32>} : memref<1x5xf32, #tpu.memory_space<vmem>>, vector<1x5xf32>,
    %34 = vector.broadcast %8 : f32 to vector<1x5xf32>
    %35 = arith.subf %30, %34 : vector<1x5xf32>
    %cst_22 = arith.constant 1.000000e-01 : f32
    %36 = vector.broadcast %cst_22 : f32 to vector<1x5xf32>
    %37 = arith.mulf %36, %35 : vector<1x5xf32>
    %38 = arith.negf %37 : vector<1x5xf32>
    %39 = math.exp %38 : vector<1x5xf32>
    %cst_23 = arith.constant 1.000000e+00 : f32
    %40 = vector.broadcast %cst_23 : f32 to vector<1x5xf32>
    %41 = arith.addf %40, %39 : vector<1x5xf32>
    %42 = arith.divf %40, %41 : vector<1x5xf32>
    %43 = vector.shape_cast %42 : vector<1x5xf32> to vector<1x1x5xf32>
    %cst_24 = arith.constant dense<0.000000e+00> : vector<1xf32>
    %44 = vector.multi_reduction <add>, %43, %cst_24 [1, 2] : vector<1x1x5xf32> to vector<1xf32>
    %45 = vector.shape_cast %44 : vector<1xf32> to vector<1x1x1xf32>
    %46 = vector.extract %45[0, 0, 0] : f32 from vector<1x1x1xf32>
    %cst_25 = arith.constant 0.0769230798 : f32
    %47 = arith.mulf %cst_25, %27 : f32
    %cst_26 = arith.constant 0.0769230798 : f32
    %48 = arith.mulf %cst_26, %46 : f32
    %49 = arith.addf %47, %48 : f32
    %c0_27 = arith.constant 0 : index
    %50 = memref.load %arg8[%c0_27] : memref<2xf32, #tpu.memory_space<smem>>
    memref.store %49, %arg8[%c0_27] : memref<2xf32, #tpu.memory_space<smem>>
    %c1 = arith.constant 1 : index
    %51 = memref.load %arg8[%c1] : memref<2xf32, #tpu.memory_space<smem>>
    memref.store %8, %arg8[%c1] : memref<2xf32, #tpu.memory_space<smem>>
    return
  }
}

</mosaic_0001>

<llo_original>
// kernel: tpu_custom_call.1
$region0: #{tpu_custom_call.1}
  #allocation0 [shape = 'u32[]', space=smem, size = 0x4, offset = 0x4, fixed_abs, tag = 'smem constant byte address 0x4 - core index']
  #allocation1 [shape = 'u32[144,128]{1,0:T(1,128)}', space=vmem, size = 0x12000, scoped, tag = 'internal scratch']
  %s0 = inlined_call_operand.hbm [shape: f32[1,8], index: 0, kind: input, shape index: {}]
  %s1 = inlined_call_operand.vmem [shape: f32[1,5], index: 1, kind: input, shape index: {}]
  %s2 = inlined_call_operand.vmem [shape: f32[1,7], index: 2, kind: input, shape index: {}]
  %s3 = inlined_call_operand.vmem [shape: f32[1,8], index: 3, kind: input, shape index: {}]
  %s4 = inlined_call_operand.vmem [shape: f32[1,5], index: 4, kind: input, shape index: {}]
  %s5 = inlined_call_operand.vmem [shape: f32[1,7], index: 5, kind: input, shape index: {}]
  %s6 = inlined_call_operand.hbm [shape: f32[1,8], index: 6, kind: output, shape index: {0}]
  %s7 = inlined_call_operand.hbm [shape: f32[1,5], index: 7, kind: output, shape index: {1}]
  %s8 = inlined_call_operand.hbm [shape: f32[2], index: 8, kind: output, shape index: {2}]
  %9 = xla_tuple %s6, %s7, %s8
  %s10 = sld [smem:[#allocation0]]
  $region54: #{tpu_custom_call.1} parent=0
    _
  %s12 = ssub.s32 1, %s10
  %s13 = scalar_select 0, %s12, %s10
  $region1: #{tpu_custom_call.1} parent=0
    #allocation2 [shape = 'u8[512]{0}', space=vmem, size = 0x400, scoped, tag = 'input window, operand 0, single buffered']
    #allocation3 [shape = 's32[1]{0}', space=sflag, size = 0x4, scoped, tag = 'scoped memory for tpu_custom_call.1']
    #allocation4 [shape = 's32[1]{0}', space=sflag, size = 0x4, scoped, tag = 'scoped memory for tpu_custom_call.1']
    #allocation5 [shape = 's32[1]{0}', space=sflag, size = 0x4, scoped, tag = 'scoped memory for tpu_custom_call.1']
    #allocation6 [shape = 'u8[512]{0}', space=vmem, size = 0x400, scoped, tag = 'output window, operand 0, single buffered']
    #allocation7 [shape = 'u8[512]{0}', space=vmem, size = 0x400, scoped, tag = 'output window, operand 1, single buffered']
    #allocation8 [shape = 's32[1]{0}', space=sflag, size = 0x4, scoped, tag = 'scoped memory for tpu_custom_call.1']
    #allocation9 [shape = 'u8[512]{0}', space=smem, size = 0x200, scoped, tag = 'output window, operand 2, single buffered']
    %14 = vsyncpa [#allocation3], 0
    %15 = vsyncpa [#allocation4], 0
    %16 = vsyncpa [#allocation8], 0
    %17 = vsyncpa [#allocation5], 0
    // Predicated region
    $region2: #{tpu_custom_call.1} parent=1 // pred_check
      _
    $region3: #{tpu_custom_call.1} parent=1 // pred_check_branch
      %19 = sbr.rel (0) target = $region5
    $region4: #{tpu_custom_call.1} parent=1 // pred_region
      %s21 = ssub.s32 16, 16
      %22 = vsyncadd [#allocation3], %s21
      %s24 = sshll.u32 [#allocation2], 4
      %s25 = int_to_ptr.vmem [resolvable:$true] %s24
      %27 = dma.hbm_to_vmem [thread:$0]  %s0, 16, %s25, [#allocation3]
    $region5: #{tpu_custom_call.1} parent=1 // pred_fallthru
      _
    // Predicated region
    $region6: #{tpu_custom_call.1} parent=1 // pred_check
      _
    $region7: #{tpu_custom_call.1} parent=1 // pred_check_branch
      %29 = sbr.rel (0) target = $region9
    $region8: #{tpu_custom_call.1} parent=1 // pred_region
      _
    $region9: #{tpu_custom_call.1} parent=1 // pred_fallthru
      _
    // Predicated region
    $region10: #{tpu_custom_call.1} parent=1 // pred_check
      _
    $region11: #{tpu_custom_call.1} parent=1 // pred_check_branch
      %31 = sbr.rel (0) target = $region13
    $region12: #{tpu_custom_call.1} parent=1 // pred_region
      _
    $region13: #{tpu_custom_call.1} parent=1 // pred_fallthru
      _
    // Predicated region
    $region14: #{tpu_custom_call.1} parent=1 // pred_check
      _
    $region15: #{tpu_custom_call.1} parent=1 // pred_check_branch
      %33 = sbr.rel (0) target = $region17
    $region16: #{tpu_custom_call.1} parent=1 // pred_region
      _
    $region17: #{tpu_custom_call.1} parent=1 // pred_fallthru
      _
    // Predicated region
    $region18: #{tpu_custom_call.1} parent=1 // pred_check
      _
    $region19: #{tpu_custom_call.1} parent=1 // pred_check_branch
      %35 = sbr.rel (0) target = $region21
    $region20: #{tpu_custom_call.1} parent=1 // pred_region
      _
    $region21: #{tpu_custom_call.1} parent=1 // pred_fallthru
      _
    // Predicated region
    $region22: #{tpu_custom_call.1} parent=1 // pred_check
      _
    $region23: #{tpu_custom_call.1} parent=1 // pred_check_branch
      %37 = sbr.rel (0) target = $region25
    $region24: #{tpu_custom_call.1} parent=1 // pred_region
      _
    $region25: #{tpu_custom_call.1} parent=1 // pred_fallthru
      _
    // Predicated region
    $region26: #{tpu_custom_call.1} parent=1 // pred_check
      _
    $region27: #{tpu_custom_call.1} parent=1 // pred_check_branch
      %39 = sbr.rel (0) target = $region29
    $region28: #{tpu_custom_call.1} parent=1 // pred_region
      %40 = dma.done [#allocation3], 16
    $region29: #{tpu_custom_call.1} parent=1 // pred_fallthru
      _
    %v41 = vld [vmem:[%s2] sm:$0x1]
    %v42 = vld [vmem:[%s5] sm:$0x1]
    %v43 = vsub.f32 %v41, %v42
    %vm44 = vcmask 49152
    %v45 = vsel %vm44, %v43, 0.0
    %46 = vadd.xlane.f32.xlu0 %v45
    %v47 = vpop.xlane.xlu0 %46
    %v48 = vrot.slane %v47, 4
    %v49 = vadd.f32 %v47, %v48
    %v50 = vrot.slane %v49, 2
    %v51 = vadd.f32 %v49, %v50
    %v52 = vrot.slane %v51, 1
    %v53 = vadd.f32 %v51, %v52
    %s54 = vtos %v53
    %s55 = smul.f32 %s54, 0.14285715
    %s56 = smax.f32 %s55, 0.0
    %v57 = vld [vmem:[#allocation2] sm:$0x1]
    %v58 = vld [vmem:[%s3] sm:$0x1]
    %v59 = vsub.f32 %v57, %v58
    %v60 = vmul.f32 %v59, 0.1
    %vm61 = vcmask 57344
    %62 = vst.msk [vmem:[#allocation6] sm:$0x1] %vm61, %v60
    %v63 = vstv %s56
    %v64 = vsub.f32 %v63, %v59
    %v65 = vmul.f32 %v64, 0.1
    %v66 = vxor.u32 %v65, 2147483648
    %v67 = vmul.f32 %v66, 1.442695
    %v68 = vpow.pop %v67
    %v69 = vadd.f32 %v68, 1.0
    %v70 = vrcp.pop %v69
    %v71 = vmul.f32 1.0, %v70
    %v72 = vsel %vm61, %v71, 0.0
    %73 = vadd.xlane.f32.xlu0 %v72
    %v74 = vpop.xlane.xlu0 %73
    %v75 = vrot.slane %v74, 4
    %v76 = vadd.f32 %v74, %v75
    %v77 = vrot.slane %v76, 2
    %v78 = vadd.f32 %v76, %v77
    %v79 = vrot.slane %v78, 1
    %v80 = vadd.f32 %v78, %v79
    %s81 = vtos %v80
    %v82 = vld [vmem:[%s1] sm:$0x1]
    %v83 = vld [vmem:[%s4] sm:$0x1]
    %v84 = vsub.f32 %v82, %v83
    %v85 = vmul.f32 %v84, 0.1
    %vm86 = vcmask 32768
    %87 = vst.msk [vmem:[#allocation7] sm:$0x1] %vm86, %v85
    %v88 = vsub.f32 %v84, %v63
    %v89 = vmul.f32 %v88, 0.1
    %v90 = vxor.u32 %v89, 2147483648
    %v91 = vmul.f32 %v90, 1.442695
    %v92 = vpow.pop %v91
    %v93 = vadd.f32 %v92, 1.0
    %v94 = vrcp.pop %v93
    %v95 = vmul.f32 1.0, %v94
    %v96 = vsel %vm86, %v95, 0.0
    %97 = vadd.xlane.f32.xlu0 %v96
    %v98 = vpop.xlane.xlu0 %97
    %v99 = vrot.slane %v98, 4
    %v100 = vadd.f32 %v98, %v99
    %v101 = vrot.slane %v100, 2
    %v102 = vadd.f32 %v100, %v101
    %v103 = vrot.slane %v102, 1
    %v104 = vadd.f32 %v102, %v103
    %s105 = vtos %v104
    %s106 = smul.f32 %s81, 0.07692308
    %s107 = smul.f32 %s105, 0.07692308
    %s108 = sadd.f32 %s106, %s107
    %s109 = scalar_lea.smem [#allocation9], 0
    %110 = sst [smem:[%s109]] %s108
    %s111 = scalar_lea.smem [#allocation9], 1
    %112 = sst [smem:[%s111]] %s56
    // Predicated region
    $region30: #{tpu_custom_call.1} parent=1 // pred_check
      _
    $region31: #{tpu_custom_call.1} parent=1 // pred_check_branch
      %114 = sbr.rel (0) target = $region33
    $region32: #{tpu_custom_call.1} parent=1 // pred_region
      %s116 = ssub.s32 16, 16
      %117 = vsyncadd [#allocation4], %s116
      %s119 = sshll.u32 [#allocation6], 4
      %s120 = int_to_ptr.vmem [resolvable:$true] %s119
      %122 = dma.vmem_to_hbm [thread:$0]  %s120, 16, %s6, [#allocation4]
    $region33: #{tpu_custom_call.1} parent=1 // pred_fallthru
      _
    // Predicated region
    $region34: #{tpu_custom_call.1} parent=1 // pred_check
      _
    $region35: #{tpu_custom_call.1} parent=1 // pred_check_branch
      %124 = sbr.rel (0) target = $region37
    $region36: #{tpu_custom_call.1} parent=1 // pred_region
      %s126 = ssub.s32 16, 16
      %127 = vsyncadd [#allocation8], %s126
      %s129 = sshll.u32 [#allocation7], 4
      %s130 = int_to_ptr.vmem [resolvable:$true] %s129
      %132 = dma.vmem_to_hbm [thread:$0]  %s130, 16, %s7, [#allocation8]
    $region37: #{tpu_custom_call.1} parent=1 // pred_fallthru
      _
    // Predicated region
    $region38: #{tpu_custom_call.1} parent=1 // pred_check
      _
    $region39: #{tpu_custom_call.1} parent=1 // pred_check_branch
      %134 = sbr.rel (0) target = $region41
    $region40: #{tpu_custom_call.1} parent=1 // pred_region
      %s136 = ssub.s32 16, 16
      %137 = vsyncadd [#allocation5], %s136
      %140 = dma.smem_to_hbm [#allocation9], 16, %s8, [#allocation5]
    $region41: #{tpu_custom_call.1} parent=1 // pred_fallthru
      _
    // Predicated region
    $region42: #{tpu_custom_call.1} parent=1 // pred_check
      _
    $region43: #{tpu_custom_call.1} parent=1 // pred_check_branch
      %142 = sbr.rel (0) target = $region45
    $region44: #{tpu_custom_call.1} parent=1 // pred_region
      %143 = dma.done [#allocation4], 16
    $region45: #{tpu_custom_call.1} parent=1 // pred_fallthru
      _
    // Predicated region
    $region46: #{tpu_custom_call.1} parent=1 // pred_check
      _
    $region47: #{tpu_custom_call.1} parent=1 // pred_check_branch
      %145 = sbr.rel (0) target = $region49
    $region48: #{tpu_custom_call.1} parent=1 // pred_region
      %146 = dma.done [#allocation8], 16
    $region49: #{tpu_custom_call.1} parent=1 // pred_fallthru
      _
    // Predicated region
    $region50: #{tpu_custom_call.1} parent=1 // pred_check
      _
    $region51: #{tpu_custom_call.1} parent=1 // pred_check_branch
      %148 = sbr.rel (0) target = $region53
    $region52: #{tpu_custom_call.1} parent=1 // pred_region
      %149 = dma.done [#allocation5], 16
    $region53: #{tpu_custom_call.1} parent=1 // pred_fallthru
      _
    %150 = sfence
    %151 = vsyncpa [#allocation3], 1
    %152 = vsyncpa [#allocation4], 1
    %153 = vsyncpa [#allocation8], 1
    %154 = vsyncpa [#allocation5], 1

</llo_original>
